<compile_context>
chip_gen: v5e
topology: v5e:2x2
jax: 0.10.0
libtpu: 0.0.40
codegen_flags: <defaults>
</compile_context>

<pallas_src>
import functools

import jax
import jax.numpy as jnp
from jax.experimental import pallas as pl
from jax.experimental.pallas import tpu as pltpu

LN_EPS = 1e-5  # PyTorch nn.LayerNorm default eps


def _round_up(x, m):
    return (x + m - 1) // m * m


def _layernorm(x, gamma, beta):
    # LayerNorm over the last dim, biased variance (matches PyTorch).
    mean = jnp.mean(x, axis=-1, keepdims=True)
    var = jnp.mean((x - mean) * (x - mean), axis=-1, keepdims=True)
    return (x - mean) * jax.lax.rsqrt(var + LN_EPS) * gamma + beta


def actor_kernel(
    x_ref,
    w1_ref, b1_ref, g1_ref, bb1_ref,
    w2_ref, b2_ref, g2_ref, bb2_ref,
    w3_ref, b3_ref,
    o_ref,
):
    x = x_ref[...].astype(jnp.float32)

    # fc1 -> LayerNorm -> ReLU
    h1 = jnp.dot(x, w1_ref[...], preferred_element_type=jnp.float32) + b1_ref[...]
    h1 = jnp.maximum(_layernorm(h1, g1_ref[...], bb1_ref[...]), 0.0)

    # fc2 -> LayerNorm -> ReLU
    h2 = jnp.dot(h1, w2_ref[...], preferred_element_type=jnp.float32) + b2_ref[...]
    h2 = jnp.maximum(_layernorm(h2, g2_ref[...], bb2_ref[...]), 0.0)

    # mu -> sigmoid (stable form; exp/logistic lands on the EUP slot)
    logits = jnp.dot(h2, w3_ref[...], preferred_element_type=jnp.float32) + b3_ref[...]
    o_ref[...] = jax.nn.sigmoid(logits).astype(o_ref.dtype)


@functools.partial(jax.jit, static_argnames=("block_b",))
def actor_forward(state, params, block_b=128):
    """Fused actor forward.  `state` is (B, input_dims) float32.

    Weights are stored transposed ((in, out)) so the kernel computes x @ W + b
    directly on the MXU.  Biases / LayerNorm params are (1, dim) rows.
    """
    (w1, b1, g1, bb1, w2, b2, g2, bb2, w3, b3) = params
    B, in_dims = state.shape
    n_actions = w3.shape[1]

    # --- Lane-dense output: zero-pad the mu columns up to a multiple of 128 ---
    n_pad = _round_up(n_actions, 128)
    if n_pad != n_actions:
        w3p = jnp.pad(w3, ((0, 0), (0, n_pad - n_actions)))
        b3p = jnp.pad(b3, ((0, 0), (0, n_pad - n_actions)))
    else:
        w3p, b3p = w3, b3

    # --- Batch tiling: TB rows per grid step (multiple of 8 sublanes) ---------
    tb = min(block_b, _round_up(B, 8))
    b_pad = _round_up(B, tb)
    xp = jnp.pad(state, ((0, b_pad - B), (0, 0))) if b_pad != B else state
    grid = (b_pad // tb,)

    # Weights/biases: constant block index -> loaded once, resident in VMEM.
    const2d = lambda a: pl.BlockSpec(a.shape, lambda i: (0, 0))

    out = pl.pallas_call(
        actor_kernel,
        out_shape=jax.ShapeDtypeStruct((b_pad, n_pad), jnp.float32),
        grid=grid,
        in_specs=[
            pl.BlockSpec((tb, in_dims), lambda i: (i, 0)),
            const2d(w1), const2d(b1), const2d(g1), const2d(bb1),
            const2d(w2), const2d(b2), const2d(g2), const2d(bb2),
            const2d(w3p), const2d(b3p),
        ],
        out_specs=pl.BlockSpec((tb, n_pad), lambda i: (i, 0)),
        compiler_params=pltpu.CompilerParams(
            dimension_semantics=("parallel",),
        ),
    )(xp, w1, b1, g1, bb1, w2, b2, g2, bb2, w3p, b3p)

    return out[:B, :n_actions]


def init_params(key, input_dims, fc1_dims, fc2_dims, n_actions):
    """Deterministic init mimicking the PyTorch module's __init__.

    fc1/fc2 weights & biases ~ U(-f, f) with f = 1/sqrt(out_features)
    (the module uses weight.size(0), i.e. out_features).
    mu weight & bias ~ U(-0.003, 0.003).  LayerNorm: gamma = 1, beta = 0.
    Weights stored as (in, out) so the kernel uses x @ W.
    """
    ks = jax.random.split(key, 6)
    f1 = 1.0 / jnp.sqrt(jnp.float32(fc1_dims))
    f2 = 1.0 / jnp.sqrt(jnp.float32(fc2_dims))
    f3 = 0.003

    w1 = jax.random.uniform(ks[0], (input_dims, fc1_dims), jnp.float32, -f1, f1)
    b1 = jax.random.uniform(ks[1], (1, fc1_dims), jnp.float32, -f1, f1)
    g1 = jnp.ones((1, fc1_dims), jnp.float32)
    bb1 = jnp.zeros((1, fc1_dims), jnp.float32)

    w2 = jax.random.uniform(ks[2], (fc1_dims, fc2_dims), jnp.float32, -f2, f2)
    b2 = jax.random.uniform(ks[3], (1, fc2_dims), jnp.float32, -f2, f2)
    g2 = jnp.ones((1, fc2_dims), jnp.float32)
    bb2 = jnp.zeros((1, fc2_dims), jnp.float32)

    w3 = jax.random.uniform(ks[4], (fc2_dims, n_actions), jnp.float32, -f3, f3)
    b3 = jax.random.uniform(ks[5], (1, n_actions), jnp.float32, -f3, f3)

    return (w1, b1, g1, bb1, w2, b2, g2, bb2, w3, b3)


def actor_forward_ref(state, params):
    """Pure-JAX reference for correctness checking."""
    (w1, b1, g1, bb1, w2, b2, g2, bb2, w3, b3) = params

    def ln(x, g, b):
        m = jnp.mean(x, -1, keepdims=True)
        v = jnp.mean((x - m) ** 2, -1, keepdims=True)
        return (x - m) / jnp.sqrt(v + LN_EPS) * g + b

    h1 = jnp.maximum(ln(state @ w1 + b1, g1, bb1), 0.0)
    h2 = jnp.maximum(ln(h1 @ w2 + b2, g2, bb2), 0.0)
    return jax.nn.sigmoid(h2 @ w3 + b3)


if __name__ == "__main__":
    key = jax.random.PRNGKey(0)
    k1, k2, k3, k4 = jax.random.split(key, 4)

    # --- Test 1: small shapes (single grid step) ------------------------------
    B, input_dims, fc1_dims, fc2_dims, n_actions = 8, 16, 64, 64, 8
    state = jax.random.normal(k1, (B, input_dims), jnp.float32)
    params = init_params(k2, input_dims, fc1_dims, fc2_dims, n_actions)

    out = actor_forward(state, params)
    jax.block_until_ready(out)
    ref = actor_forward_ref(state, params)
    assert out.shape == (B, n_actions)
    assert jnp.allclose(out, ref, atol=1e-5, rtol=1e-4), "mismatch vs reference (small)"

    # --- Test 2: realistic MADDPG sizes -> multi-step batch grid + padding ----
    B2, in2, f1d, f2d, na2 = 300, 24, 400, 300, 5
    state2 = jax.random.normal(k3, (B2, in2), jnp.float32)
    params2 = init_params(k4, in2, f1d, f2d, na2)

    out2 = actor_forward(state2, params2)   # grid=(3,), TB=128, n padded to 128
    jax.block_until_ready(out2)
    ref2 = actor_forward_ref(state2, params2)
    assert out2.shape == (B2, na2)
    assert jnp.allclose(out2, ref2, atol=1e-5, rtol=1e-4), "mismatch vs reference (large)"

    print("KERNEL_OK")
</pallas_src>

<mosaic_0001>
module attributes {stable_mosaic.version = 11 : i64} {
  func.func @actor_kernel(%arg0: i32, %arg1: memref<8x16xf32, #tpu.memory_space<vmem>>, %arg2: memref<16x64xf32, #tpu.memory_space<vmem>>, %arg3: memref<1x64xf32, #tpu.memory_space<vmem>>, %arg4: memref<1x64xf32, #tpu.memory_space<vmem>>, %arg5: memref<1x64xf32, #tpu.memory_space<vmem>>, %arg6: memref<64x64xf32, #tpu.memory_space<vmem>>, %arg7: memref<1x64xf32, #tpu.memory_space<vmem>>, %arg8: memref<1x64xf32, #tpu.memory_space<vmem>>, %arg9: memref<1x64xf32, #tpu.memory_space<vmem>>, %arg10: memref<64x128xf32, #tpu.memory_space<vmem>>, %arg11: memref<1x128xf32, #tpu.memory_space<vmem>>, %arg12: memref<8x128xf32, #tpu.memory_space<vmem>>) attributes {dimension_semantics = [#tpu.dimension_semantics<parallel>], iteration_bounds = array<i64: 1>, scalar_prefetch = 0 : i64, scratch_operands = 0 : i64, tpu.core_type = #tpu.core_type<tc>, window_params = [{transform_indices = @transform_0, window_bounds = array<i64: 8, 16>}, {pipeline_mode = #tpu.pipeline_mode<synchronous>, transform_indices = @transform_1, window_bounds = array<i64: 16, 64>}, {pipeline_mode = #tpu.pipeline_mode<synchronous>, transform_indices = @transform_2, window_bounds = array<i64: 1, 64>}, {pipeline_mode = #tpu.pipeline_mode<synchronous>, transform_indices = @transform_3, window_bounds = array<i64: 1, 64>}, {pipeline_mode = #tpu.pipeline_mode<synchronous>, transform_indices = @transform_4, window_bounds = array<i64: 1, 64>}, {pipeline_mode = #tpu.pipeline_mode<synchronous>, transform_indices = @transform_5, window_bounds = array<i64: 64, 64>}, {pipeline_mode = #tpu.pipeline_mode<synchronous>, transform_indices = @transform_6, window_bounds = array<i64: 1, 64>}, {pipeline_mode = #tpu.pipeline_mode<synchronous>, transform_indices = @transform_7, window_bounds = array<i64: 1, 64>}, {pipeline_mode = #tpu.pipeline_mode<synchronous>, transform_indices = @transform_8, window_bounds = array<i64: 1, 64>}, {pipeline_mode = #tpu.pipeline_mode<synchronous>, transform_indices = @transform_9, window_bounds = array<i64: 64, 128>}, {pipeline_mode = #tpu.pipeline_mode<synchronous>, transform_indices = @transform_10, window_bounds = array<i64: 1, 128>}, {transform_indices = @transform_11, window_bounds = array<i64: 8, 128>}]} {
    %c0 = arith.constant 0 : index
    %c0_0 = arith.constant 0 : index
    %0 = vector.load %arg1[%c0, %c0_0] : memref<8x16xf32, #tpu.memory_space<vmem>>, vector<8x16xf32>
    %c0_1 = arith.constant 0 : index
    %c0_2 = arith.constant 0 : index
    %1 = vector.load %arg2[%c0_1, %c0_2] : memref<16x64xf32, #tpu.memory_space<vmem>>, vector<16x64xf32>
    %cst = arith.constant dense<0.000000e+00> : vector<8x64xf32>
    %2 = tpu.matmul %0, %1, %cst {dimension_numbers = #tpu.dot_dimension_numbers<[1], [0], [0], [1], [0, 0, 1, 1], [], []>} : vector<8x16xf32>, vector<16x64xf32>, vector<8x64xf32> -> vector<8x64xf32>
    %c0_3 = arith.constant 0 : index
    %c0_4 = arith.constant 0 : index
    %3 = vector.load %arg3[%c0_3, %c0_4] : memref<1x64xf32, #tpu.memory_space<vmem>>, vector<1x64xf32>
    %4 = vector.broadcast %3 : vector<1x64xf32> to vector<8x64xf32>
    %5 = arith.addf %2, %4 : vector<8x64xf32>
    %c0_5 = arith.constant 0 : index
    %c0_6 = arith.constant 0 : index
    %6 = vector.load %arg4[%c0_5, %c0_6] : memref<1x64xf32, #tpu.memory_space<vmem>>, vector<1x64xf32>
    %c0_7 = arith.constant 0 : index
    %c0_8 = arith.constant 0 : index
    %7 = vector.load %arg5[%c0_7, %c0_8] : memref<1x64xf32, #tpu.memory_space<vmem>>, vector<1x64xf32>
    %cst_9 = arith.constant dense<0.000000e+00> : vector<8xf32>
    %8 = vector.multi_reduction <add>, %5, %cst_9 [1] : vector<8x64xf32> to vector<8xf32>
    %9 = vector.shape_cast %8 : vector<8xf32> to vector<8x1xf32>
    %cst_10 = arith.constant 6.400000e+01 : f32
    %10 = vector.broadcast %cst_10 : f32 to vector<8x1xf32>
    %11 = arith.divf %9, %10 : vector<8x1xf32>
    %12 = vector.broadcast %11 : vector<8x1xf32> to vector<8x64xf32>
    %13 = arith.subf %5, %12 : vector<8x64xf32>
    %14 = vector.broadcast %11 : vector<8x1xf32> to vector<8x64xf32>
    %15 = arith.subf %5, %14 : vector<8x64xf32>
    %16 = arith.mulf %13, %15 : vector<8x64xf32>
    %cst_11 = arith.constant dense<0.000000e+00> : vector<8xf32>
    %17 = vector.multi_reduction <add>, %16, %cst_11 [1] : vector<8x64xf32> to vector<8xf32>
    %18 = vector.shape_cast %17 : vector<8xf32> to vector<8x1xf32>
    %cst_12 = arith.constant 6.400000e+01 : f32
    %19 = vector.broadcast %cst_12 : f32 to vector<8x1xf32>
    %20 = arith.divf %18, %19 : vector<8x1xf32>
    %21 = vector.broadcast %11 : vector<8x1xf32> to vector<8x64xf32>
    %22 = arith.subf %5, %21 : vector<8x64xf32>
    %cst_13 = arith.constant 9.99999974E-6 : f32
    %23 = vector.broadcast %cst_13 : f32 to vector<8x1xf32>
    %24 = arith.addf %20, %23 : vector<8x1xf32>
    %25 = math.rsqrt %24 : vector<8x1xf32>
    %26 = vector.broadcast %25 : vector<8x1xf32> to vector<8x64xf32>
    %27 = arith.mulf %22, %26 : vector<8x64xf32>
    %28 = vector.broadcast %6 : vector<1x64xf32> to vector<8x64xf32>
    %29 = arith.mulf %27, %28 : vector<8x64xf32>
    %30 = vector.broadcast %7 : vector<1x64xf32> to vector<8x64xf32>
    %31 = arith.addf %29, %30 : vector<8x64xf32>
    %cst_14 = arith.constant 0.000000e+00 : f32
    %32 = vector.broadcast %cst_14 : f32 to vector<8x64xf32>
    %33 = arith.maximumf %31, %32 : vector<8x64xf32>
    %c0_15 = arith.constant 0 : index
    %c0_16 = arith.constant 0 : index
    %34 = vector.load %arg6[%c0_15, %c0_16] : memref<64x64xf32, #tpu.memory_space<vmem>>, vector<64x64xf32>
    %cst_17 = arith.constant dense<0.000000e+00> : vector<8x64xf32>
    %35 = tpu.matmul %33, %34, %cst_17 {dimension_numbers = #tpu.dot_dimension_numbers<[1], [0], [0], [1], [0, 0, 1, 1], [], []>} : vector<8x64xf32>, vector<64x64xf32>, vector<8x64xf32> -> vector<8x64xf32>
    %c0_18 = arith.constant 0 : index
    %c0_19 = arith.constant 0 : index
    %36 = vector.load %arg7[%c0_18, %c0_19] : memref<1x64xf32, #tpu.memory_space<vmem>>, vector<1x64xf32>
    %37 = vector.broadcast %36 : vector<1x64xf32> to vector<8x64xf32>
    %38 = arith.addf %35, %37 : vector<8x64xf32>
    %c0_20 = arith.constant 0 : index
    %c0_21 = arith.constant 0 : index
    %39 = vector.load %arg8[%c0_20, %c0_21] : memref<1x64xf32, #tpu.memory_space<vmem>>, vector<1x64xf32>
    %c0_22 = arith.constant 0 : index
    %c0_23 = arith.constant 0 : index
    %40 = vector.load %arg9[%c0_22, %c0_23] : memref<1x64xf32, #tpu.memory_space<vmem>>, vector<1x64xf32>
    %cst_24 = arith.constant dense<0.000000e+00> : vector<8xf32>
    %41 = vector.multi_reduction <add>, %38, %cst_24 [1] : vector<8x64xf32> to vector<8xf32>
    %42 = vector.shape_cast %41 : vector<8xf32> to vector<8x1xf32>
    %cst_25 = arith.constant 6.400000e+01 : f32
    %43 = vector.broadcast %cst_25 : f32 to vector<8x1xf32>
    %44 = arith.divf %42, %43 : vector<8x1xf32>
    %45 = vector.broadcast %44 : vector<8x1xf32> to vector<8x64xf32>
    %46 = arith.subf %38, %45 : vector<8x64xf32>
    %47 = vector.broadcast %44 : vector<8x1xf32> to vector<8x64xf32>
    %48 = arith.subf %38, %47 : vector<8x64xf32>
    %49 = arith.mulf %46, %48 : vector<8x64xf32>
    %cst_26 = arith.constant dense<0.000000e+00> : vector<8xf32>
    %50 = vector.multi_reduction <add>, %49, %cst_26 [1] : vector<8x64xf32> to vector<8xf32>
    %51 = vector.shape_cast %50 : vector<8xf32> to vector<8x1xf32>
    %cst_27 = arith.constant 6.400000e+01 : f32
    %52 = vector.broadcast %cst_27 : f32 to vector<8x1xf32>
    %53 = arith.divf %51, %52 : vector<8x1xf32>
    %54 = vector.broadcast %44 : vector<8x1xf32> to vector<8x64xf32>
    %55 = arith.subf %38, %54 : vector<8x64xf32>
    %cst_28 = arith.constant 9.99999974E-6 : f32
    %56 = vector.broadcast %cst_28 : f32 to vector<8x1xf32>
    %57 = arith.addf %53, %56 : vector<8x1xf32>
    %58 = math.rsqrt %57 : vector<8x1xf32>
    %59 = vector.broadcast %58 : vector<8x1xf32> to vector<8x64xf32>
    %60 = arith.mulf %55, %59 : vector<8x64xf32>
    %61 = vector.broadcast %39 : vector<1x64xf32> to vector<8x64xf32>
    %62 = arith.mulf %60, %61 : vector<8x64xf32>
    %63 = vector.broadcast %40 : vector<1x64xf32> to vector<8x64xf32>
    %64 = arith.addf %62, %63 : vector<8x64xf32>
    %cst_29 = arith.constant 0.000000e+00 : f32
    %65 = vector.broadcast %cst_29 : f32 to vector<8x64xf32>
    %66 = arith.maximumf %64, %65 : vector<8x64xf32>
    %c0_30 = arith.constant 0 : index
    %c0_31 = arith.constant 0 : index
    %67 = vector.load %arg10[%c0_30, %c0_31] : memref<64x128xf32, #tpu.memory_space<vmem>>, vector<64x128xf32>
    %cst_32 = arith.constant dense<0.000000e+00> : vector<8x128xf32>
    %68 = tpu.matmul %66, %67, %cst_32 {dimension_numbers = #tpu.dot_dimension_numbers<[1], [0], [0], [1], [0, 0, 1, 1], [], []>} : vector<8x64xf32>, vector<64x128xf32>, vector<8x128xf32> -> vector<8x128xf32>
    %c0_33 = arith.constant 0 : index
    %c0_34 = arith.constant 0 : index
    %69 = vector.load %arg11[%c0_33, %c0_34] : memref<1x128xf32, #tpu.memory_space<vmem>>, vector<1x128xf32>
    %70 = vector.broadcast %69 : vector<1x128xf32> to vector<8x128xf32>
    %71 = arith.addf %68, %70 : vector<8x128xf32>
    %72 = arith.negf %71 : vector<8x128xf32>
    %73 = math.exp %72 : vector<8x128xf32>
    %cst_35 = arith.constant 1.000000e+00 : f32
    %74 = vector.broadcast %cst_35 : f32 to vector<8x128xf32>
    %75 = arith.addf %74, %73 : vector<8x128xf32>
    %76 = arith.divf %74, %75 : vector<8x128xf32>
    %c0_36 = arith.constant 0 : index
    %c0_37 = arith.constant 0 : index
    %77 = vector.load %arg12[%c0_36, %c0_37] : memref<8x128xf32, #tpu.memory_space<vmem>>, vector<8x128xf32>
    tpu.vector_store %arg12[%c0_36, %c0_37], %76 {strides = array<i32>} : memref<8x128xf32, #tpu.memory_space<vmem>>, vector<8x128xf32>,
    return
  }
  func.func @transform_0(%arg0: i32) -> (i32, i32) {
    %c0_i32 = arith.constant 0 : i32
    %c0_i32_0 = arith.constant 0 : i32
    return %arg0, %c0_i32 : i32, i32
  }
  func.func @transform_1(%arg0: i32) -> (i32, i32) {
    %c0_i32 = arith.constant 0 : i32
    %c0_i32_0 = arith.constant 0 : i32
    %c0_i32_1 = arith.constant 0 : i32
    return %c0_i32, %c0_i32_0 : i32, i32
  }
  func.func @transform_2(%arg0: i32) -> (i32, i32) {
    %c0_i32 = arith.constant 0 : i32
    %c0_i32_0 = arith.constant 0 : i32
    %c0_i32_1 = arith.constant 0 : i32
    return %c0_i32, %c0_i32_0 : i32, i32
  }
  func.func @transform_3(%arg0: i32) -> (i32, i32) {
    %c0_i32 = arith.constant 0 : i32
    %c0_i32_0 = arith.constant 0 : i32
    %c0_i32_1 = arith.constant 0 : i32
    return %c0_i32, %c0_i32_0 : i32, i32
  }
  func.func @transform_4(%arg0: i32) -> (i32, i32) {
    %c0_i32 = arith.constant 0 : i32
    %c0_i32_0 = arith.constant 0 : i32
    %c0_i32_1 = arith.constant 0 : i32
    return %c0_i32, %c0_i32_0 : i32, i32
  }
  func.func @transform_5(%arg0: i32) -> (i32, i32) {
    %c0_i32 = arith.constant 0 : i32
    %c0_i32_0 = arith.constant 0 : i32
    %c0_i32_1 = arith.constant 0 : i32
    return %c0_i32, %c0_i32_0 : i32, i32
  }
  func.func @transform_6(%arg0: i32) -> (i32, i32) {
    %c0_i32 = arith.constant 0 : i32
    %c0_i32_0 = arith.constant 0 : i32
    %c0_i32_1 = arith.constant 0 : i32
    return %c0_i32, %c0_i32_0 : i32, i32
  }
  func.func @transform_7(%arg0: i32) -> (i32, i32) {
    %c0_i32 = arith.constant 0 : i32
    %c0_i32_0 = arith.constant 0 : i32
    %c0_i32_1 = arith.constant 0 : i32
    return %c0_i32, %c0_i32_0 : i32, i32
  }
  func.func @transform_8(%arg0: i32) -> (i32, i32) {
    %c0_i32 = arith.constant 0 : i32
    %c0_i32_0 = arith.constant 0 : i32
    %c0_i32_1 = arith.constant 0 : i32
    return %c0_i32, %c0_i32_0 : i32, i32
  }
  func.func @transform_9(%arg0: i32) -> (i32, i32) {
    %c0_i32 = arith.constant 0 : i32
    %c0_i32_0 = arith.constant 0 : i32
    %c0_i32_1 = arith.constant 0 : i32
    return %c0_i32, %c0_i32_0 : i32, i32
  }
  func.func @transform_10(%arg0: i32) -> (i32, i32) {
    %c0_i32 = arith.constant 0 : i32
    %c0_i32_0 = arith.constant 0 : i32
    %c0_i32_1 = arith.constant 0 : i32
    return %c0_i32, %c0_i32_0 : i32, i32
  }
  func.func @transform_11(%arg0: i32) -> (i32, i32) {
    %c0_i32 = arith.constant 0 : i32
    %c0_i32_0 = arith.constant 0 : i32
    return %arg0, %c0_i32 : i32, i32
  }
}

</mosaic_0001>

<llo_original>
// kernel: actor_forward.1
$region0: #{actor_forward.1}
  #allocation0 [shape = 'u32[]', space=smem, size = 0x4, offset = 0x4, fixed_abs, tag = 'smem constant byte address 0x4 - core index']
  #allocation1 [shape = 'u32[72,128]{1,0:T(1,128)}', space=vmem, size = 0x9000, scoped, tag = 'internal scratch']
  %s0 = inlined_call_operand.vmem [shape: f32[8,16], index: 0, kind: input, shape index: {}]
  %s1 = inlined_call_operand.vmem [shape: f32[16,64], index: 1, kind: input, shape index: {}]
  %s2 = inlined_call_operand.vmem [shape: f32[1,64], index: 2, kind: input, shape index: {}]
  %s3 = inlined_call_operand.vmem [shape: f32[1,64], index: 3, kind: input, shape index: {}]
  %s4 = inlined_call_operand.vmem [shape: f32[1,64], index: 4, kind: input, shape index: {}]
  %s5 = inlined_call_operand.vmem [shape: f32[64,64], index: 5, kind: input, shape index: {}]
  %s6 = inlined_call_operand.vmem [shape: f32[1,64], index: 6, kind: input, shape index: {}]
  %s7 = inlined_call_operand.vmem [shape: f32[1,64], index: 7, kind: input, shape index: {}]
  %s8 = inlined_call_operand.vmem [shape: f32[1,64], index: 8, kind: input, shape index: {}]
  %s9 = inlined_call_operand.vmem [shape: f32[64,128], index: 9, kind: input, shape index: {}]
  %s10 = inlined_call_operand.vmem [shape: f32[1,128], index: 10, kind: input, shape index: {}]
  %s11 = inlined_call_operand.hbm [shape: f32[8,128], index: 11, kind: output, shape index: {}]
  %s12 = sld [smem:[#allocation0]]
  $region54: #{actor_forward.1} parent=0
    _
  %s14 = ssub.s32 1, %s12
  %s15 = scalar_select 0, %s14, %s12
  $region1: #{actor_forward.1} parent=0
    #allocation2 [shape = 'u8[4096]{0}', space=vmem, size = 0x1000, scoped, tag = 'output window, operand 0, single buffered']
    #allocation3 [shape = 's32[1]{0}', space=sflag, size = 0x4, scoped, tag = 'scoped memory for actor_forward.1']
    %16 = vsyncpa [#allocation3], 0
    // Predicated region
    $region2: #{actor_forward.1} parent=1 // pred_check
      _
    $region3: #{actor_forward.1} parent=1 // pred_check_branch
      %18 = sbr.rel (0) target = $region5
    $region4: #{actor_forward.1} parent=1 // pred_region
      _
    $region5: #{actor_forward.1} parent=1 // pred_fallthru
      _
    // Predicated region
    $region6: #{actor_forward.1} parent=1 // pred_check
      _
    $region7: #{actor_forward.1} parent=1 // pred_check_branch
      %20 = sbr.rel (0) target = $region9
    $region8: #{actor_forward.1} parent=1 // pred_region
      _
    $region9: #{actor_forward.1} parent=1 // pred_fallthru
      _
    // Predicated region
    $region10: #{actor_forward.1} parent=1 // pred_check
      _
    $region11: #{actor_forward.1} parent=1 // pred_check_branch
      %22 = sbr.rel (0) target = $region13
    $region12: #{actor_forward.1} parent=1 // pred_region
      _
    $region13: #{actor_forward.1} parent=1 // pred_fallthru
      _
    // Predicated region
    $region14: #{actor_forward.1} parent=1 // pred_check
      _
    $region15: #{actor_forward.1} parent=1 // pred_check_branch
      %24 = sbr.rel (0) target = $region17
    $region16: #{actor_forward.1} parent=1 // pred_region
      _
    $region17: #{actor_forward.1} parent=1 // pred_fallthru
      _
    // Predicated region
    $region18: #{actor_forward.1} parent=1 // pred_check
      _
    $region19: #{actor_forward.1} parent=1 // pred_check_branch
      %26 = sbr.rel (0) target = $region21
    $region20: #{actor_forward.1} parent=1 // pred_region
      _
    $region21: #{actor_forward.1} parent=1 // pred_fallthru
      _
    // Predicated region
    $region22: #{actor_forward.1} parent=1 // pred_check
      _
    $region23: #{actor_forward.1} parent=1 // pred_check_branch
      %28 = sbr.rel (0) target = $region25
    $region24: #{actor_forward.1} parent=1 // pred_region
      _
    $region25: #{actor_forward.1} parent=1 // pred_fallthru
      _
    // Predicated region
    $region26: #{actor_forward.1} parent=1 // pred_check
      _
    $region27: #{actor_forward.1} parent=1 // pred_check_branch
      %30 = sbr.rel (0) target = $region29
    $region28: #{actor_forward.1} parent=1 // pred_region
      _
    $region29: #{actor_forward.1} parent=1 // pred_fallthru
      _
    // Predicated region
    $region30: #{actor_forward.1} parent=1 // pred_check
      _
    $region31: #{actor_forward.1} parent=1 // pred_check_branch
      %32 = sbr.rel (0) target = $region33
    $region32: #{actor_forward.1} parent=1 // pred_region
      _
    $region33: #{actor_forward.1} parent=1 // pred_fallthru
      _
    // Predicated region
    $region34: #{actor_forward.1} parent=1 // pred_check
      _
    $region35: #{actor_forward.1} parent=1 // pred_check_branch
      %34 = sbr.rel (0) target = $region37
    $region36: #{actor_forward.1} parent=1 // pred_region
      _
    $region37: #{actor_forward.1} parent=1 // pred_fallthru
      _
    // Predicated region
    $region38: #{actor_forward.1} parent=1 // pred_check
      _
    $region39: #{actor_forward.1} parent=1 // pred_check_branch
      %36 = sbr.rel (0) target = $region41
    $region40: #{actor_forward.1} parent=1 // pred_region
      _
    $region41: #{actor_forward.1} parent=1 // pred_fallthru
      _
    // Predicated region
    $region42: #{actor_forward.1} parent=1 // pred_check
      _
    $region43: #{actor_forward.1} parent=1 // pred_check_branch
      %38 = sbr.rel (0) target = $region45
    $region44: #{actor_forward.1} parent=1 // pred_region
      _
    $region45: #{actor_forward.1} parent=1 // pred_fallthru
      _
    %v39 = vld [vmem:[%s0] sm:$0xff]
    %v40 = vld [vmem:[%s1] sm:$0xff]
    %v41 = vld [vmem:[%s1 + $0x8] sm:$0xff]
    %v42 = vld [vmem:[%s2] sm:$0x1]
    %v44 = vperm.slane %v42, 0
    %vm46 = vcmask 130048
    %v48 = vsel %vm46, %v39, 0
    %50 = vmatpush.msra.mxu0 0.0
    %51 = vmatpush.msra.mxu0 0.0
    %52 = vmatpush.msra.mxu0 0.0
    %53 = vmatpush.msra.mxu0 0.0
    %54 = vmatpush.msra.mxu0 0.0
    %55 = vmatpush.msra.mxu0 0.0
    %56 = vmatpush.msra.mxu0 0.0
    %57 = vmatpush.msra.mxu0 0.0
    %58 = vmatpush.msra.mxu0 0.0
    %59 = vmatpush.msra.mxu0 0.0
    %60 = vmatpush.msra.mxu0 0.0
    %61 = vmatpush.msra.mxu0 0.0
    %62 = vmatpush.msra.mxu0 0.0
    %63 = vmatpush.msra.mxu0 0.0
    %64 = vmatpush.msra.mxu0 %v41
    %65 = vmatpush.msra.mxu0 %v40
    %66 = vmatmul.f32.gmra.mxu0 %v48
    %v67 = vpop.f32.mrf.mxu0
    %v68 = vadd.f32 %v44, %v67
    %69 = vdwg.mxu0
    %v70 = vld [vmem:[%s3] sm:$0x1]
    %v71 = vld [vmem:[%s4] sm:$0x1]
    %vm72 = vcmask 523264
    %v73 = vsel %vm72, %v68, 0.0
    %74 = vadd.xlane.f32.xlu0 %v73
    %v75 = vpop.xlane.xlu0 %74
    %v76 = vrcp.pop 64.0
    %v77 = vmul.f32 64.0, %v76
    %v78 = vsub.f32 1.0, %v77
    %v79 = vmul.f32 %v76, %v78
    %v80 = vadd.f32 %v76, %v79
    %vm81 = vweird.f32 %v76
    %v82 = vsel %vm81, %v76, %v80
    %v83 = vmul.f32 %v75, %v82
    %v84 = vsub.f32 %v68, %v83
    %v85 = vmul.f32 %v84, %v84
    %v86 = vsel %vm72, %v85, 0.0
    %87 = vadd.xlane.f32.xlu0 %v86
    %v88 = vpop.xlane.xlu0 %87
    %v89 = vmul.f32 %v88, %v82
    %v90 = vadd.f32 %v89, 1e-05
    %v91 = vrsqrt.pop %v90
    %v92 = vmul.f32 %v91, %v90
    %v93 = vmul.f32 %v92, %v91
    %v94 = vmul.f32 0.5, %v93
    %v95 = vsub.f32 1.5, %v94
    %v96 = vmul.f32 %v91, %v95
    %vm97 = vweird.f32 %v90
    %vm98 = vweird.f32 %v91
    %vm99 = vmor %vm97, %vm98
    %v100 = vsel %vm99, %v91, %v96
    %v101 = vmul.f32 %v84, %v100
    %v103 = vperm.slane %v70, 0
    %v105 = vmul.f32 %v101, %v103
    %v107 = vperm.slane %v71, 0
    %v109 = vadd.f32 %v105, %v107
    %v110 = vmax.f32 %v109, 0.0
    %v111 = vld [vmem:[%s5] sm:$0xff]
    %v112 = vld [vmem:[%s5 + $0x8] sm:$0xff]
    %v113 = vld [vmem:[%s5 + $0x10] sm:$0xff]
    %v114 = vld [vmem:[%s5 + $0x18] sm:$0xff]
    %v115 = vld [vmem:[%s5 + $0x20] sm:$0xff]
    %v116 = vld [vmem:[%s5 + $0x28] sm:$0xff]
    %v117 = vld [vmem:[%s5 + $0x30] sm:$0xff]
    %v118 = vld [vmem:[%s5 + $0x38] sm:$0xff]
    %v119 = vld [vmem:[%s6] sm:$0x1]
    %v121 = vperm.slane %v119, 0
    %v124 = vsel %vm72, %v110, 0
    %126 = vmatpush.msra.mxu0 0.0
    %127 = vmatpush.msra.mxu0 0.0
    %128 = vmatpush.msra.mxu0 0.0
    %129 = vmatpush.msra.mxu0 0.0
    %130 = vmatpush.msra.mxu0 0.0
    %131 = vmatpush.msra.mxu0 0.0
    %132 = vmatpush.msra.mxu0 0.0
    %133 = vmatpush.msra.mxu0 0.0
    %134 = vmatpush.msra.mxu0 %v118
    %135 = vmatpush.msra.mxu0 %v117
    %136 = vmatpush.msra.mxu0 %v116
    %137 = vmatpush.msra.mxu0 %v115
    %138 = vmatpush.msra.mxu0 %v114
    %139 = vmatpush.msra.mxu0 %v113
    %140 = vmatpush.msra.mxu0 %v112
    %141 = vmatpush.msra.mxu0 %v111
    %142 = vmatmul.f32.gmra.mxu0 %v124
    %v143 = vpop.f32.mrf.mxu0
    %v144 = vadd.f32 %v121, %v143
    %145 = vdwg.mxu0
    %v146 = vld [vmem:[%s7] sm:$0x1]
    %v147 = vld [vmem:[%s8] sm:$0x1]
    %v148 = vsel %vm72, %v144, 0.0
    %149 = vadd.xlane.f32.xlu0 %v148
    %v150 = vpop.xlane.xlu0 %149
    %v151 = vmul.f32 %v150, %v82
    %v152 = vsub.f32 %v144, %v151
    %v153 = vmul.f32 %v152, %v152
    %v154 = vsel %vm72, %v153, 0.0
    %155 = vadd.xlane.f32.xlu0 %v154
    %v156 = vpop.xlane.xlu0 %155
    %v157 = vmul.f32 %v156, %v82
    %v158 = vadd.f32 %v157, 1e-05
    %v159 = vrsqrt.pop %v158
    %v160 = vmul.f32 %v159, %v158
    %v161 = vmul.f32 %v160, %v159
    %v162 = vmul.f32 0.5, %v161
    %v163 = vsub.f32 1.5, %v162
    %v164 = vmul.f32 %v159, %v163
    %vm165 = vweird.f32 %v158
    %vm166 = vweird.f32 %v159
    %vm167 = vmor %vm165, %vm166
    %v168 = vsel %vm167, %v159, %v164
    %v169 = vmul.f32 %v152, %v168
    %v171 = vperm.slane %v146, 0
    %v173 = vmul.f32 %v169, %v171
    %v175 = vperm.slane %v147, 0
    %v177 = vadd.f32 %v173, %v175
    %v178 = vmax.f32 %v177, 0.0
    %v179 = vld [vmem:[%s9] sm:$0xff]
    %v180 = vld [vmem:[%s9 + $0x8] sm:$0xff]
    %v181 = vld [vmem:[%s9 + $0x10] sm:$0xff]
    %v182 = vld [vmem:[%s9 + $0x18] sm:$0xff]
    %v183 = vld [vmem:[%s9 + $0x20] sm:$0xff]
    %v184 = vld [vmem:[%s9 + $0x28] sm:$0xff]
    %v185 = vld [vmem:[%s9 + $0x30] sm:$0xff]
    %v186 = vld [vmem:[%s9 + $0x38] sm:$0xff]
    %v187 = vld [vmem:[%s10] sm:$0x1]
    %v189 = vperm.slane %v187, 0
    %v192 = vsel %vm72, %v178, 0
    %194 = vmatpush.msra.mxu0 0.0
    %195 = vmatpush.msra.mxu0 0.0
    %196 = vmatpush.msra.mxu0 0.0
    %197 = vmatpush.msra.mxu0 0.0
    %198 = vmatpush.msra.mxu0 0.0
    %199 = vmatpush.msra.mxu0 0.0
    %200 = vmatpush.msra.mxu0 0.0
    %201 = vmatpush.msra.mxu0 0.0
    %202 = vmatpush.msra.mxu0 %v186
    %203 = vmatpush.msra.mxu0 %v185
    %204 = vmatpush.msra.mxu0 %v184
    %205 = vmatpush.msra.mxu0 %v183
    %206 = vmatpush.msra.mxu0 %v182
    %207 = vmatpush.msra.mxu0 %v181
    %208 = vmatpush.msra.mxu0 %v180
    %209 = vmatpush.msra.mxu0 %v179
    %210 = vmatmul.f32.gmra.mxu0 %v192
    %v211 = vpop.f32.mrf.mxu0
    %v212 = vadd.f32 %v189, %v211
    %213 = vdwg.mxu0
    %v214 = vxor.u32 %v212, 2147483648
    %v215 = vmul.f32 %v214, 1.442695
    %v216 = vpow.pop %v215
    %v217 = vadd.f32 %v216, 1.0
    %v218 = vrcp.pop %v217
    %v219 = vmul.f32 %v217, %v218
    %v220 = vsub.f32 1.0, %v219
    %v221 = vmul.f32 %v218, %v220
    %v222 = vadd.f32 %v218, %v221
    %vm223 = vweird.f32 %v217
    %vm224 = vweird.f32 %v218
    %vm225 = vmor %vm223, %vm224
    %v226 = vsel %vm225, %v218, %v222
    %v227 = vand.u32 2147483647, %v217
    %vm228 = vcmp.eq.f32.partialorder %v227, 8.507059e+37
    %v229 = vand.u32 %v217, 2147483648
    %v230 = vor.u32 1.1754944e-38, %v229
    %v231 = vsel %vm228, %v230, %v226
    %v232 = vmul.f32 1.0, %v231
    %233 = vst [vmem:[#allocation2] sm:$0xff] %v232
    // Predicated region
    $region46: #{actor_forward.1} parent=1 // pred_check
      _
    $region47: #{actor_forward.1} parent=1 // pred_check_branch
      %235 = sbr.rel (0) target = $region49
    $region48: #{actor_forward.1} parent=1 // pred_region
      %237 = vsyncadd [#allocation3], 0
      %s239 = sshll.u32 [#allocation2], 4
      %s240 = int_to_ptr.vmem [resolvable:$true] %s239
      %s241 = sshll.u32 %s11, 4
      %s242 = int_to_ptr.hbm [resolvable:$true] %s241
      %244 = dma.vmem_to_hbm [thread:$0]  %s240, 128, %s242, [#allocation3]
    $region49: #{actor_forward.1} parent=1 // pred_fallthru
      _
    // Predicated region
    $region50: #{actor_forward.1} parent=1 // pred_check
      _
    $region51: #{actor_forward.1} parent=1 // pred_check_branch
      %246 = sbr.rel (0) target = $region53
    $region52: #{actor_forward.1} parent=1 // pred_region
      %248 = dma.done [#allocation3], 128
    $region53: #{actor_forward.1} parent=1 // pred_fallthru
      _
    %249 = vsyncpa [#allocation3], 1

</llo_original>
